<compile_context>
chip_gen: v6e
topology: v6e:2x2x1
jax: 0.10.0
libtpu: 0.0.40
codegen_flags: <defaults>
</compile_context>

<pallas_src>
import functools

import jax
import jax.numpy as jnp
from jax.experimental import pallas as pl
from jax.experimental.pallas import tpu as pltpu


def _round_up(a, m):
    return (a + m - 1) // m * m


def _pick_tile(dim, cap):
    """Largest multiple of 128 that divides `dim` (a multiple of 128) and is <= cap."""
    cap = max(128, cap)
    best = 128
    t = 128
    while t <= min(cap, dim):
        if dim % t == 0:
            best = t
        t += 128
    return best


def _vmem_limit_bytes():
    # Conservative default = v7x (64 MiB per TensorCore).
    cap = 64 * 1024 * 1024
    try:
        info = pltpu.get_tpu_info()
        cap = int(getattr(info, "vmem_capacity_bytes", cap))
    except Exception:
        pass
    # v5e/v6e (128 MiB physical) -> ~100 MiB; v7x (64 MiB/TC) -> ~52 MiB.
    return max(32 * 1024 * 1024, min(100 * 1024 * 1024, cap - 12 * 1024 * 1024))


# ---------------------------------------------------------------------------
# f32 output: accumulate directly into the k-resident output block.
# NOTE: correct ONLY because k is the innermost grid axis and the output
# index_map ignores k (the block stays resident in VMEM across the k loop).
# ---------------------------------------------------------------------------
def _gemm_relu_div_direct_kernel(x_ref, w_ref, b_ref, o_ref, *, inv_divisor):
    k = pl.program_id(2)

    @pl.when(k == 0)
    def _():
        o_ref[...] = jnp.zeros_like(o_ref)

    o_ref[...] += jnp.dot(
        x_ref[...], w_ref[...], preferred_element_type=jnp.float32
    )

    @pl.when(k == pl.num_programs(2) - 1)
    def _():
        o_ref[...] = jnp.maximum(o_ref[...] + b_ref[...], 0.0) * inv_divisor


# ---------------------------------------------------------------------------
# non-f32 output: f32 VMEM accumulator + cast in the epilogue.
# ---------------------------------------------------------------------------
def _gemm_relu_div_acc_kernel(x_ref, w_ref, b_ref, o_ref, acc_ref, *, inv_divisor):
    k = pl.program_id(2)

    @pl.when(k == 0)
    def _():
        acc_ref[...] = jnp.zeros_like(acc_ref)

    acc_ref[...] += jnp.dot(
        x_ref[...], w_ref[...], preferred_element_type=jnp.float32
    )

    @pl.when(k == pl.num_programs(2) - 1)
    def _():
        y = jnp.maximum(acc_ref[...] + b_ref[...], 0.0) * inv_divisor
        o_ref[...] = y.astype(o_ref.dtype)


def gemm_relu_divide(x, w, b, divisor, *, tm=None, tn=None, tk=None):
    """x: (M, K), w: (K, N), b: (N,) -> (M, N) = relu(x @ w + b) / divisor."""
    M, K = x.shape
    K2, N = w.shape
    assert K == K2 and b.shape == (N,)
    inv = 1.0 / float(divisor)

    # Round to the (8, 128) layout grain.  For typical Linear shapes (K, N
    # multiples of 128) no weight padding or output slicing happens; only x
    # and the bias (both small) may be padded.
    Mp, Kp, Np = _round_up(M, 128), _round_up(K, 128), _round_up(N, 128)

    # ---- tile selection ---------------------------------------------------
    # Caps chosen so the double-buffered working set
    # 2*(tm*tk + tk*tn + tm*tn)*4B (~16 MiB at 512/1024/1024) fits every
    # generation's VMEM, including v7x's 64 MiB/TC.
    if tm is None:
        tm = _pick_tile(Mp, 512)
    if tn is None:
        tn = _pick_tile(Np, 1024)
    if tk is None:
        tk = _pick_tile(Kp, 1024)

    # Megacore: guarantee >= 2 (i, j) output blocks so v7x's second TensorCore
    # has work (harmless on single-TC chips: only a tiny x/out re-stream).
    if (Mp // tm) * (Np // tn) < 2:
        if Np // tn < 2 and Np >= 256:
            tn = _pick_tile(Np, tn // 2)
        elif Mp // tm < 2 and Mp >= 256:
            tm = _pick_tile(Mp, tm // 2)

    # DMA/compute overlap: at least 2 k-steps so the next x/w tiles stream in
    # while the MXU works on the current ones (per-step overhead ~0.35us).
    if Kp // tk < 2 and Kp >= 256:
        tk = _pick_tile(Kp, tk // 2)

    assert Mp % tm == 0 and Np % tn == 0 and Kp % tk == 0
    grid = (Mp // tm, Np // tn, Kp // tk)

    # ---- padding (x / bias cheap; W only if K or N isn't a 128-multiple) ---
    xp = jnp.pad(x, ((0, Mp - M), (0, Kp - K))) if (Mp, Kp) != (M, K) else x
    # TODO(synk): handle ragged K/N edges with an in-kernel mask / remainder
    # tile instead of padding the weight when K/N aren't multiples of 128.
    wp = jnp.pad(w, ((0, Kp - K), (0, Np - N))) if (Kp, Np) != (K, N) else w
    bp = (jnp.pad(b, (0, Np - N)) if Np != N else b).reshape(1, Np)

    if jnp.dtype(x.dtype) == jnp.float32:
        kernel = functools.partial(_gemm_relu_div_direct_kernel, inv_divisor=inv)
        scratch = []
    else:
        kernel = functools.partial(_gemm_relu_div_acc_kernel, inv_divisor=inv)
        scratch = [pltpu.VMEM((tm, tn), jnp.float32)]

    out = pl.pallas_call(
        kernel,
        out_shape=jax.ShapeDtypeStruct((Mp, Np), x.dtype),
        grid_spec=pltpu.PrefetchScalarGridSpec(
            num_scalar_prefetch=0,
            grid=grid,
            in_specs=[
                pl.BlockSpec((tm, tk), lambda i, j, k: (i, k)),
                pl.BlockSpec((tk, tn), lambda i, j, k: (k, j)),
                # Bias block index only changes when j changes (k innermost),
                # so it is effectively resident across the whole k loop; a
                # (1, tn) tile keeps the epilogue free of lane-dim dynamic
                # slicing while costing at most one tiny DMA per j block.
                pl.BlockSpec((1, tn), lambda i, j, k: (0, j)),
            ],
            out_specs=pl.BlockSpec((tm, tn), lambda i, j, k: (i, j)),
            scratch_shapes=scratch,
        ),
        compiler_params=pltpu.CompilerParams(
            dimension_semantics=("parallel", "parallel", "arbitrary"),
            vmem_limit_bytes=_vmem_limit_bytes(),
        ),
    )(xp, wp, bp)

    if (Mp, Np) != (M, N):
        out = out[:M, :N]
    return out


if __name__ == "__main__":
    # Shapes consistent with the module: in_features=1024, out_features=512.
    batch, in_features, out_features = 128, 1024, 512
    divisor = 2.0

    key = jax.random.PRNGKey(0)
    kx, kw, kb = jax.random.split(key, 3)

    x = jax.random.normal(kx, (batch, in_features), dtype=jnp.float32)
    # nn.Linear weight is (out_features, in_features); we store its transpose.
    w_t = jax.random.normal(kw, (out_features, in_features), dtype=jnp.float32) * 0.02
    b = jax.random.normal(kb, (out_features,), dtype=jnp.float32) * 0.02
    w = w_t.T  # (in_features, out_features)

    ref = jnp.maximum(x @ w + b, 0.0) / divisor

    # Default tile selection (grid = (1, 2, 2) for these shapes).
    out = jax.block_until_ready(gemm_relu_divide(x, w, b, divisor))
    assert out.shape == (batch, out_features)
    assert jnp.allclose(out, ref, atol=1e-4, rtol=1e-4)

    # Explicit smaller tiles: exercises a deeper k loop and more (i, j) blocks.
    out2 = jax.block_until_ready(
        gemm_relu_divide(x, w, b, divisor, tm=128, tn=256, tk=256)
    )
    assert out2.shape == (batch, out_features)
    assert jnp.allclose(out2, ref, atol=1e-4, rtol=1e-4)

    print("KERNEL_OK")
</pallas_src>

<mosaic_0001>
module attributes {stable_mosaic.version = 11 : i64} {
  func.func @_gemm_relu_div_direct_kernel(%arg0: i32, %arg1: i32, %arg2: i32, %arg3: memref<128x512xf32, #tpu.memory_space<vmem>>, %arg4: memref<512x256xf32, #tpu.memory_space<vmem>>, %arg5: memref<1x256xf32, #tpu.memory_space<vmem>>, %arg6: memref<128x256xf32, #tpu.memory_space<vmem>>) attributes {dimension_semantics = [#tpu.dimension_semantics<parallel>, #tpu.dimension_semantics<parallel>, #tpu.dimension_semantics<arbitrary>], iteration_bounds = array<i64: 1, 2, 2>, scalar_prefetch = 0 : i64, scratch_operands = 0 : i64, tpu.core_type = #tpu.core_type<tc>, window_params = [{transform_indices = @transform_0, window_bounds = array<i64: 128, 512>}, {transform_indices = @transform_1, window_bounds = array<i64: 512, 256>}, {transform_indices = @transform_2, window_bounds = array<i64: 1, 256>}, {transform_indices = @transform_3, window_bounds = array<i64: 128, 256>}]} {
    %c0_i32 = arith.constant 0 : i32
    %0 = arith.cmpi eq, %arg2, %c0_i32 : i32
    %1 = arith.extui %0 : i1 to i32
    %c0_i32_0 = arith.constant 0 : i32
    %2 = arith.cmpi ne, %1, %c0_i32_0 : i32
    scf.if %2 {
      %cst_9 = arith.constant 0.000000e+00 : f32
      %12 = vector.broadcast %cst_9 : f32 to vector<128x256xf32>
      %c0_10 = arith.constant 0 : index
      %c0_11 = arith.constant 0 : index
      %13 = vector.load %arg6[%c0_10, %c0_11] : memref<128x256xf32, #tpu.memory_space<vmem>>, vector<128x256xf32>
      tpu.vector_store %arg6[%c0_10, %c0_11], %12 {strides = array<i32>} : memref<128x256xf32, #tpu.memory_space<vmem>>, vector<128x256xf32>,
    } else {
    }
    %c0 = arith.constant 0 : index
    %c0_1 = arith.constant 0 : index
    %3 = vector.load %arg6[%c0, %c0_1] : memref<128x256xf32, #tpu.memory_space<vmem>>, vector<128x256xf32>
    %c0_2 = arith.constant 0 : index
    %c0_3 = arith.constant 0 : index
    %4 = vector.load %arg3[%c0_2, %c0_3] : memref<128x512xf32, #tpu.memory_space<vmem>>, vector<128x512xf32>
    %c0_4 = arith.constant 0 : index
    %c0_5 = arith.constant 0 : index
    %5 = vector.load %arg4[%c0_4, %c0_5] : memref<512x256xf32, #tpu.memory_space<vmem>>, vector<512x256xf32>
    %cst = arith.constant dense<0.000000e+00> : vector<128x256xf32>
    %6 = tpu.matmul %4, %5, %cst {dimension_numbers = #tpu.dot_dimension_numbers<[1], [0], [0], [1], [0, 0, 1, 1], [], []>} : vector<128x512xf32>, vector<512x256xf32>, vector<128x256xf32> -> vector<128x256xf32>
    %7 = arith.addf %3, %6 : vector<128x256xf32>
    %c0_6 = arith.constant 0 : index
    %c0_7 = arith.constant 0 : index
    %8 = vector.load %arg6[%c0_6, %c0_7] : memref<128x256xf32, #tpu.memory_space<vmem>>, vector<128x256xf32>
    tpu.vector_store %arg6[%c0_6, %c0_7], %7 {strides = array<i32>} : memref<128x256xf32, #tpu.memory_space<vmem>>, vector<128x256xf32>,
    %c1_i32 = arith.constant 1 : i32
    %9 = arith.cmpi eq, %arg2, %c1_i32 : i32
    %10 = arith.extui %9 : i1 to i32
    %c0_i32_8 = arith.constant 0 : i32
    %11 = arith.cmpi ne, %10, %c0_i32_8 : i32
    scf.if %11 {
      %c0_9 = arith.constant 0 : index
      %c0_10 = arith.constant 0 : index
      %12 = vector.load %arg6[%c0_9, %c0_10] : memref<128x256xf32, #tpu.memory_space<vmem>>, vector<128x256xf32>
      %c0_11 = arith.constant 0 : index
      %c0_12 = arith.constant 0 : index
      %13 = vector.load %arg5[%c0_11, %c0_12] : memref<1x256xf32, #tpu.memory_space<vmem>>, vector<1x256xf32>
      %14 = vector.broadcast %13 : vector<1x256xf32> to vector<128x256xf32>
      %15 = arith.addf %12, %14 : vector<128x256xf32>
      %cst_13 = arith.constant 0.000000e+00 : f32
      %16 = vector.broadcast %cst_13 : f32 to vector<128x256xf32>
      %17 = arith.maximumf %15, %16 : vector<128x256xf32>
      %cst_14 = arith.constant 5.000000e-01 : f32
      %18 = vector.broadcast %cst_14 : f32 to vector<128x256xf32>
      %19 = arith.mulf %17, %18 : vector<128x256xf32>
      %c0_15 = arith.constant 0 : index
      %c0_16 = arith.constant 0 : index
      %20 = vector.load %arg6[%c0_15, %c0_16] : memref<128x256xf32, #tpu.memory_space<vmem>>, vector<128x256xf32>
      tpu.vector_store %arg6[%c0_15, %c0_16], %19 {strides = array<i32>} : memref<128x256xf32, #tpu.memory_space<vmem>>, vector<128x256xf32>,
    } else {
    }
    return
  }
  func.func @transform_0(%arg0: i32, %arg1: i32, %arg2: i32) -> (i32, i32) {
    %c0_i32 = arith.constant 0 : i32
    return %arg0, %arg2 : i32, i32
  }
  func.func @transform_1(%arg0: i32, %arg1: i32, %arg2: i32) -> (i32, i32) {
    %c0_i32 = arith.constant 0 : i32
    return %arg2, %arg1 : i32, i32
  }
  func.func @transform_2(%arg0: i32, %arg1: i32, %arg2: i32) -> (i32, i32) {
    %c0_i32 = arith.constant 0 : i32
    %c0_i32_0 = arith.constant 0 : i32
    return %c0_i32, %arg1 : i32, i32
  }
  func.func @transform_3(%arg0: i32, %arg1: i32, %arg2: i32) -> (i32, i32) {
    %c0_i32 = arith.constant 0 : i32
    return %arg0, %arg1 : i32, i32
  }
}

</mosaic_0001>

<llo_original>
// kernel: tpu_custom_call.1
$region0: #{tpu_custom_call.1}
  #allocation0 [shape = 'u32[]', space=smem, size = 0x4, offset = 0x4, fixed_abs, tag = 'smem constant byte address 0x4 - core index']
  #allocation1 [shape = 'u32[144,128]{1,0:T(1,128)}', space=vmem, size = 0x12000, scoped, tag = 'internal scratch']
  %s0 = inlined_call_operand.hbm [shape: f32[128,1024], index: 0, kind: input, shape index: {}]
  %s1 = inlined_call_operand.hbm [shape: f32[1024,512], index: 1, kind: input, shape index: {}]
  %s2 = inlined_call_operand.hbm [shape: f32[1,512], index: 2, kind: input, shape index: {}]
  %s3 = inlined_call_operand.hbm [shape: f32[128,512], index: 3, kind: output, shape index: {}]
  %s4 = sld [smem:[#allocation0]]
  $region65: #{tpu_custom_call.1} parent=0
    _
  %s6 = ssub.s32 1, %s4
  %s7 = scalar_select 0, %s6, %s4
  $region1: #{tpu_custom_call.1} parent=0
    #allocation2 [shape = 'u8[524288]{0}', space=vmem, size = 0x80000, scoped, tag = 'input window, operand 0']
    #allocation3 [shape = 's32[2]{0}', space=sflag, size = 0x8, scoped, tag = 'scoped memory for tpu_custom_call.1']
    #allocation4 [shape = 's32[2]{0}', space=sflag, size = 0x8, scoped, tag = 'scoped memory for tpu_custom_call.1']
    #allocation5 [shape = 'u8[1048576]{0}', space=vmem, size = 0x100000, scoped, tag = 'input window, operand 1']
    #allocation6 [shape = 's32[2]{0}', space=sflag, size = 0x8, scoped, tag = 'scoped memory for tpu_custom_call.1']
    #allocation7 [shape = 'u8[2048]{0}', space=vmem, size = 0x800, scoped, tag = 'input window, operand 2']
    #allocation8 [shape = 'u8[262144]{0}', space=vmem, size = 0x40000, scoped, tag = 'output window, operand 0']
    %8 = vsyncpa [#allocation3], 0
    %s9 = scalar_lea.sflag [#allocation3], 1
    %10 = vsyncpa %s9, 0
    %11 = vsyncpa [#allocation6], 0
    %s12 = scalar_lea.sflag [#allocation6], 1
    %13 = vsyncpa %s12, 0
    %14 = vsyncpa [#allocation4], 0
    %s15 = scalar_lea.sflag [#allocation4], 1
    %16 = vsyncpa %s15, 0
    loop: start=0, step=1, limit=6
    $region2: #{tpu_custom_call.1} parent=1 // loop_pre_header
      _
    $region3: #{tpu_custom_call.1} parent=1 // loop_header
      %s18 = sphi 0, %s22
      %p19 = scmp.ge.s32.totalorder %s18, 6
      %s25 = sphi 0, %s44
      %s26 = sphi 0, %s40
      %s27 = sphi 0, %s36
      %s28 = sphi 0, %s25
      %s29 = sphi 0, %s26
      %s30 = sphi 0, %s27
      %s31 = sphi 0, %s28
      %s32 = sphi 0, %s29
      %s33 = sphi 0, %s30
      %s49 = sphi 0, %s51
      %s52 = sphi 0, %s49
      %s53 = sphi 0, %s52
      %s69 = sphi 0, %s53
      %s77 = sphi 0, %s79
      %s80 = sphi 0, %s77
      %s81 = sphi 0, %s80
      %s97 = sphi 0, %s81
      %s103 = sphi 0, %s105
      %s106 = sphi 0, %s103
      %s107 = sphi 0, %s106
      %s123 = sphi 0, %s107
      %s131 = sphi 0, %s133
      %s134 = sphi 0, %s131
      %s135 = sphi 0, %s134
      %s151 = sphi 0, %s135
    $region4: #{tpu_custom_call.1} parent=1 // loop_header_branch
      %21 = sbr.rel (%p19) target = $region8
    $region5: #{tpu_custom_call.1} parent=1 // loop_body
      %s23 = ssub.s32 %s18, 1
      %s24 = ssub.s32 %s18, 2
      %s34 = sadd.s32 1, %s27
      %p35 = scmp.ge.s32.totalorder %s34, 2
      %s36 = scalar_select %p35, 0, %s34
      %s37 = sadd.s32 1, %s26
      %s38 = scalar_select %p35, %s37, %s26
      %p39 = scmp.ge.s32.totalorder %s38, 2
      %s40 = scalar_select %p39, 0, %s38
      %s41 = sadd.s32 1, %s25
      %s42 = scalar_select %p39, %s41, %s25
      %p43 = scmp.ge.s32.totalorder %s42, 1
      %s44 = scalar_select %p43, 0, %s42
      %s45 = ssub.s32 %s25, %s44
      %s46 = ssub.s32 %s27, %s36
      %s47 = sor.u32 %s45, %s46
      %p48 = scmp.eq.s32.totalorder %s47, 0
      %s50 = sadd.s32 %s49, 1
      %s51 = scalar_select %p48, %s49, %s50
      %p54 = pneg %p48
      %p55 = scmp.eq.s32.totalorder %s18, 3
      %p56 = por %p54, %p55
      %p57 = scmp.ne.s32.totalorder %s49, %s52
      %p58 = scmp.eq.s32.totalorder %s18, 0
      %p59 = por %p57, %p58
      %p60 = scmp.ne.s32.totalorder %s49, %s52
      %p61 = scmp.eq.s32.totalorder %s23, 3
      %p62 = por %p60, %p61
      %p63 = scmp.ne.s32.totalorder %s52, %s53
      %p64 = scmp.eq.s32.totalorder %s23, 0
      %p65 = por %p63, %p64
      %p66 = scmp.ne.s32.totalorder %s52, %s53
      %p67 = scmp.eq.s32.totalorder %s24, 3
      %p68 = por %p66, %p67
      %p70 = scmp.ne.s32.totalorder %s53, %s69
      %p71 = scmp.eq.s32.totalorder %s24, 0
      %p72 = por %p70, %p71
      %s73 = ssub.s32 %s27, %s36
      %s74 = ssub.s32 %s26, %s40
      %s75 = sor.u32 %s73, %s74
      %p76 = scmp.eq.s32.totalorder %s75, 0
      %s78 = sadd.s32 %s77, 1
      %s79 = scalar_select %p76, %s77, %s78
      %p82 = pneg %p76
      %p83 = scmp.eq.s32.totalorder %s18, 3
      %p84 = por %p82, %p83
      %p85 = scmp.ne.s32.totalorder %s77, %s80
      %p86 = scmp.eq.s32.totalorder %s18, 0
      %p87 = por %p85, %p86
      %p88 = scmp.ne.s32.totalorder %s77, %s80
      %p89 = scmp.eq.s32.totalorder %s23, 3
      %p90 = por %p88, %p89
      %p91 = scmp.ne.s32.totalorder %s80, %s81
      %p92 = scmp.eq.s32.totalorder %s23, 0
      %p93 = por %p91, %p92
      %p94 = scmp.ne.s32.totalorder %s80, %s81
      %p95 = scmp.eq.s32.totalorder %s24, 3
      %p96 = por %p94, %p95
      %p98 = scmp.ne.s32.totalorder %s81, %s97
      %p99 = scmp.eq.s32.totalorder %s24, 0
      %p100 = por %p98, %p99
      %s101 = ssub.s32 %s26, %s40
      %p102 = scmp.eq.s32.totalorder %s101, 0
      %s104 = sadd.s32 %s103, 1
      %s105 = scalar_select %p102, %s103, %s104
      %p108 = pneg %p102
      %p109 = scmp.eq.s32.totalorder %s18, 3
      %p110 = por %p108, %p109
      %p111 = scmp.ne.s32.totalorder %s103, %s106
      %p112 = scmp.eq.s32.totalorder %s18, 0
      %p113 = por %p111, %p112
      %p114 = scmp.ne.s32.totalorder %s103, %s106
      %p115 = scmp.eq.s32.totalorder %s23, 3
      %p116 = por %p114, %p115
      %p117 = scmp.ne.s32.totalorder %s106, %s107
      %p118 = scmp.eq.s32.totalorder %s23, 0
      %p119 = por %p117, %p118
      %p120 = scmp.ne.s32.totalorder %s106, %s107
      %p121 = scmp.eq.s32.totalorder %s24, 3
      %p122 = por %p120, %p121
      %p124 = scmp.ne.s32.totalorder %s107, %s123
      %p125 = scmp.eq.s32.totalorder %s24, 0
      %p126 = por %p124, %p125
      %s127 = ssub.s32 %s25, %s44
      %s128 = ssub.s32 %s26, %s40
      %s129 = sor.u32 %s127, %s128
      %p130 = scmp.eq.s32.totalorder %s129, 0
      %s132 = sadd.s32 %s131, 1
      %s133 = scalar_select %p130, %s131, %s132
      %p136 = pneg %p130
      %p137 = scmp.eq.s32.totalorder %s18, 3
      %p138 = por %p136, %p137
      %p139 = scmp.ne.s32.totalorder %s131, %s134
      %p140 = scmp.eq.s32.totalorder %s18, 0
      %p141 = por %p139, %p140
      %p142 = scmp.ne.s32.totalorder %s131, %s134
      %p143 = scmp.eq.s32.totalorder %s23, 3
      %p144 = por %p142, %p143
      %p145 = scmp.ne.s32.totalorder %s134, %s135
      %p146 = scmp.eq.s32.totalorder %s23, 0
      %p147 = por %p145, %p146
      %p148 = scmp.ne.s32.totalorder %s134, %s135
      %p149 = scmp.eq.s32.totalorder %s24, 3
      %p150 = por %p148, %p149
      %p152 = scmp.ne.s32.totalorder %s135, %s151
      %p153 = scmp.eq.s32.totalorder %s24, 0
      %p154 = por %p152, %p153
      %p155 = scmp.le.s32.totalorder 1, %s18
      %p156 = scmp.lt.s32.totalorder %s18, 5
      %p157 = pnand %p155, %p156
      %p158 = pneg %p157
      // Predicated region
      $region9: #{tpu_custom_call.1} parent=5 // pred_check
        _
      $region10: #{tpu_custom_call.1} parent=5 // pred_check_branch
        %160 = sbr.rel (%p157) target = $region12
      $region11: #{tpu_custom_call.1} parent=5 // pred_region
        %s161 = ssub.s32 %s18, 1
      $region12: #{tpu_custom_call.1} parent=5 // pred_fallthru
        _
      %p162 = scmp.lt.s32.totalorder %s18, 4
      // Predicated region
      $region13: #{tpu_custom_call.1} parent=5 // pred_check
        %p163 = pneg %p162
      $region14: #{tpu_custom_call.1} parent=5 // pred_check_branch
        %165 = sbr.rel (%p163) target = $region16
      $region15: #{tpu_custom_call.1} parent=5 // pred_region
        // Predicated region
        $region17: #{tpu_custom_call.1} parent=15 // pred_check
          %p166 = pneg %p59
        $region18: #{tpu_custom_call.1} parent=15 // pred_check_branch
          %168 = sbr.rel (%p166) target = $region20
        $region19: #{tpu_custom_call.1} parent=15 // pred_region
          %s169 = sand.u32 %s49, 1
          %s170 = scalar_lea.sflag [#allocation3], %s169
          %s171 = sand.u32 %s49, 1
          %s172 = smul.addr %s171, 512
          %s173 = scalar_lea.vmem [#allocation2], %s172
          %s174 = smul.u32 16, %s25
          %s175 = smul.u32 4, %s27
          %s177 = ssub.s32 8192, 8192
          %178 = vsyncadd %s170, %s177
          %s179 = smul.addr %s174, 8
          %s180 = sadd.s32 %s175, %s179
          %s181 = smul.addr %s180, 128
          %s182 = scalar_lea.hbm %s0, %s181
          %s183 = sshll.u32 %s173, 4
          %s184 = int_to_ptr.vmem [resolvable:$true] %s183
          %189 = dma.hbm_to_vmem [thread:$0]  %s182, 8192, %s184, %s170, 1024, 512, 32
        $region20: #{tpu_custom_call.1} parent=15 // pred_fallthru
          _
        // Predicated region
        $region21: #{tpu_custom_call.1} parent=15 // pred_check
          %p190 = pneg %p87
        $region22: #{tpu_custom_call.1} parent=15 // pred_check_branch
          %192 = sbr.rel (%p190) target = $region24
        $region23: #{tpu_custom_call.1} parent=15 // pred_region
          %s193 = sand.u32 %s18, 1
          %s194 = scalar_lea.sflag [#allocation6], %s193
          %s195 = sand.u32 %s77, 1
          %s196 = smul.addr %s195, 1024
          %s197 = scalar_lea.vmem [#allocation5], %s196
          %s198 = smul.u32 64, %s27
          %s199 = smul.u32 2, %s26
          %s201 = ssub.s32 16384, 16384
          %202 = vsyncadd %s194, %s201
          %s203 = smul.addr %s198, 4
          %s204 = sadd.s32 %s199, %s203
          %s205 = smul.addr %s204, 128
          %s206 = scalar_lea.hbm %s1, %s205
          %s207 = sshll.u32 %s197, 4
          %s208 = int_to_ptr.vmem [resolvable:$true] %s207
          %213 = dma.hbm_to_vmem [thread:$0]  %s206, 16384, %s208, %s194, 512, 256, 16
        $region24: #{tpu_custom_call.1} parent=15 // pred_fallthru
          _
        // Predicated region
        $region25: #{tpu_custom_call.1} parent=15 // pred_check
          %p214 = pneg %p113
        $region26: #{tpu_custom_call.1} parent=15 // pred_check_branch
          %216 = sbr.rel (%p214) target = $region28
        $region27: #{tpu_custom_call.1} parent=15 // pred_region
          %s217 = sand.u32 %s18, 1
          %s218 = scalar_lea.sflag [#allocation6], %s217
          %s219 = sand.u32 %s103, 1
          %s220 = smul.addr %s219, 2
          %s221 = scalar_lea.vmem [#allocation7], %s220
          %s222 = smul.u32 2, %s26
          %s224 = ssub.s32 32, 32
          %225 = vsyncadd %s218, %s224
          %s226 = smul.addr %s222, 16
          %s227 = scalar_lea.hbm %s2, %s226
          %s229 = sshll.u32 %s221, 4
          %s230 = int_to_ptr.vmem [resolvable:$true] %s229
          %232 = dma.hbm_to_vmem [thread:$0]  %s227, 32, %s230, %s218
        $region28: #{tpu_custom_call.1} parent=15 // pred_fallthru
          _
      $region16: #{tpu_custom_call.1} parent=5 // pred_fallthru
        _
      %p233 = scmp.le.s32.totalorder 1, %s18
      %p234 = scmp.lt.s32.totalorder %s18, 5
      %p235 = pnand %p233, %p234
      %p236 = pneg %p235
      // Predicated region
      $region29: #{tpu_custom_call.1} parent=5 // pred_check
        _
      $region30: #{tpu_custom_call.1} parent=5 // pred_check_branch
        %238 = sbr.rel (%p235) target = $region32
      $region31: #{tpu_custom_call.1} parent=5 // pred_region
        %s239 = ssub.s32 %s18, 1
        %s240 = sand.u32 %s52, 1
        %s241 = scalar_lea.sflag [#allocation3], %s240
        %s242 = sand.u32 %s52, 1
        %s243 = smul.addr %s242, 512
        %s244 = scalar_lea.vmem [#allocation2], %s243
        // Predicated region
        $region33: #{tpu_custom_call.1} parent=31 // pred_check
          %p245 = pneg %p65
        $region34: #{tpu_custom_call.1} parent=31 // pred_check_branch
          %247 = sbr.rel (%p245) target = $region36
        $region35: #{tpu_custom_call.1} parent=31 // pred_region
          %248 = dma.done %s241, 8192
        $region36: #{tpu_custom_call.1} parent=31 // pred_fallthru
          _
        %s249 = sand.u32 %s23, 1
        %s250 = scalar_lea.sflag [#allocation6], %s249
        %s251 = sand.u32 %s80, 1
        %s252 = smul.addr %s251, 1024
        %s253 = scalar_lea.vmem [#allocation5], %s252
        // Predicated region
        $region37: #{tpu_custom_call.1} parent=31 // pred_check
          %p254 = pneg %p93
        $region38: #{tpu_custom_call.1} parent=31 // pred_check_branch
          %256 = sbr.rel (%p254) target = $region40
        $region39: #{tpu_custom_call.1} parent=31 // pred_region
          %257 = dma.done %s250, 16384
        $region40: #{tpu_custom_call.1} parent=31 // pred_fallthru
          _
        %s258 = sand.u32 %s23, 1
        %s259 = scalar_lea.sflag [#allocation6], %s258
        %s260 = sand.u32 %s106, 1
        %s261 = smul.addr %s260, 2
        %s262 = scalar_lea.vmem [#allocation7], %s261
        // Predicated region
        $region41: #{tpu_custom_call.1} parent=31 // pred_check
          %p263 = pneg %p119
        $region42: #{tpu_custom_call.1} parent=31 // pred_check_branch
          %265 = sbr.rel (%p263) target = $region44
        $region43: #{tpu_custom_call.1} parent=31 // pred_region
          %266 = dma.done %s259, 32
        $region44: #{tpu_custom_call.1} parent=31 // pred_fallthru
          _
        %s267 = sand.u32 %s52, 1
        %s268 = scalar_lea.sflag [#allocation3], %s267
        %s269 = sand.u32 %s52, 1
        %s270 = smul.addr %s269, 512
        %s271 = scalar_lea.vmem [#allocation2], %s270
        %p272 = pneg %p65
        %p273 = pneg %p62
        %s274 = sand.u32 %s23, 1
        %s275 = scalar_lea.sflag [#allocation6], %s274
        %s276 = sand.u32 %s80, 1
        %s277 = smul.addr %s276, 1024
        %s278 = scalar_lea.vmem [#allocation5], %s277
        %p279 = pneg %p93
        %p280 = pneg %p90
        %s281 = sand.u32 %s23, 1
        %s282 = scalar_lea.sflag [#allocation6], %s281
        %s283 = sand.u32 %s106, 1
        %s284 = smul.addr %s283, 2
        %s285 = scalar_lea.vmem [#allocation7], %s284
        %p286 = pneg %p119
        %p287 = pneg %p116
        %p288 = pneg %p147
        %p289 = pneg %p144
        %s290 = sand.u32 %s134, 1
        %s291 = scalar_lea.sflag [#allocation4], %s290
        %s292 = sand.u32 %s134, 1
        %s293 = smul.addr %s292, 256
        %s294 = scalar_lea.vmem [#allocation8], %s293
        %s295 = smul.u32 16, %s28
        %s296 = smul.u32 4, %s30
        %s297 = smul.u32 64, %s30
        %s298 = smul.u32 2, %s29
        %s299 = smul.u32 2, %s29
        %s300 = smul.u32 16, %s28
        %s301 = smul.u32 2, %s29
        %p302 = scmp.eq.s32.totalorder %s30, 0
        // Predicated region
        $region45: #{tpu_custom_call.1} parent=31 // pred_check
          %p303 = pneg %p302
        $region46: #{tpu_custom_call.1} parent=31 // pred_check_branch
          %305 = sbr.rel (%p303) target = $region48
        $region47: #{tpu_custom_call.1} parent=31 // pred_region
          %306 = vst [vmem:[%s294] sm:$0xff] 0.0
          %307 = vst [vmem:[%s294 + $0x8] sm:$0xff] 0.0
          %308 = vst [vmem:[%s294 + $0x10] sm:$0xff] 0.0
          %309 = vst [vmem:[%s294 + $0x18] sm:$0xff] 0.0
          %310 = vst [vmem:[%s294 + $0x20] sm:$0xff] 0.0
          %311 = vst [vmem:[%s294 + $0x28] sm:$0xff] 0.0
          %312 = vst [vmem:[%s294 + $0x30] sm:$0xff] 0.0
          %313 = vst [vmem:[%s294 + $0x38] sm:$0xff] 0.0
          %314 = vst [vmem:[%s294 + $0x40] sm:$0xff] 0.0
          %315 = vst [vmem:[%s294 + $0x48] sm:$0xff] 0.0
          %316 = vst [vmem:[%s294 + $0x50] sm:$0xff] 0.0
          %317 = vst [vmem:[%s294 + $0x58] sm:$0xff] 0.0
          %318 = vst [vmem:[%s294 + $0x60] sm:$0xff] 0.0
          %319 = vst [vmem:[%s294 + $0x68] sm:$0xff] 0.0
          %320 = vst [vmem:[%s294 + $0x70] sm:$0xff] 0.0
          %321 = vst [vmem:[%s294 + $0x78] sm:$0xff] 0.0
          %322 = vst [vmem:[%s294 + $0x80] sm:$0xff] 0.0
          %323 = vst [vmem:[%s294 + $0x88] sm:$0xff] 0.0
          %324 = vst [vmem:[%s294 + $0x90] sm:$0xff] 0.0
          %325 = vst [vmem:[%s294 + $0x98] sm:$0xff] 0.0
          %326 = vst [vmem:[%s294 + $0xa0] sm:$0xff] 0.0
          %327 = vst [vmem:[%s294 + $0xa8] sm:$0xff] 0.0
          %328 = vst [vmem:[%s294 + $0xb0] sm:$0xff] 0.0
          %329 = vst [vmem:[%s294 + $0xb8] sm:$0xff] 0.0
          %330 = vst [vmem:[%s294 + $0xc0] sm:$0xff] 0.0
          %331 = vst [vmem:[%s294 + $0xc8] sm:$0xff] 0.0
          %332 = vst [vmem:[%s294 + $0xd0] sm:$0xff] 0.0
          %333 = vst [vmem:[%s294 + $0xd8] sm:$0xff] 0.0
          %334 = vst [vmem:[%s294 + $0xe0] sm:$0xff] 0.0
          %335 = vst [vmem:[%s294 + $0xe8] sm:$0xff] 0.0
          %336 = vst [vmem:[%s294 + $0xf0] sm:$0xff] 0.0
          %337 = vst [vmem:[%s294 + $0xf8] sm:$0xff] 0.0
        $region48: #{tpu_custom_call.1} parent=31 // pred_fallthru
          _
        %v338 = vld [vmem:[%s294] sm:$0xff]
        %v339 = vld [vmem:[%s294 + $0x8] sm:$0xff]
        %v340 = vld [vmem:[%s294 + $0x10] sm:$0xff]
        %v341 = vld [vmem:[%s294 + $0x18] sm:$0xff]
        %v342 = vld [vmem:[%s294 + $0x20] sm:$0xff]
        %v343 = vld [vmem:[%s294 + $0x28] sm:$0xff]
        %v344 = vld [vmem:[%s294 + $0x30] sm:$0xff]
        %v345 = vld [vmem:[%s294 + $0x38] sm:$0xff]
        %v346 = vld [vmem:[%s294 + $0x40] sm:$0xff]
        %v347 = vld [vmem:[%s294 + $0x48] sm:$0xff]
        %v348 = vld [vmem:[%s294 + $0x50] sm:$0xff]
        %v349 = vld [vmem:[%s294 + $0x58] sm:$0xff]
        %v350 = vld [vmem:[%s294 + $0x60] sm:$0xff]
        %v351 = vld [vmem:[%s294 + $0x68] sm:$0xff]
        %v352 = vld [vmem:[%s294 + $0x70] sm:$0xff]
        %v353 = vld [vmem:[%s294 + $0x78] sm:$0xff]
        %v354 = vld [vmem:[%s294 + $0x80] sm:$0xff]
        %v355 = vld [vmem:[%s294 + $0x88] sm:$0xff]
        %v356 = vld [vmem:[%s294 + $0x90] sm:$0xff]
        %v357 = vld [vmem:[%s294 + $0x98] sm:$0xff]
        %v358 = vld [vmem:[%s294 + $0xa0] sm:$0xff]
        %v359 = vld [vmem:[%s294 + $0xa8] sm:$0xff]
        %v360 = vld [vmem:[%s294 + $0xb0] sm:$0xff]
        %v361 = vld [vmem:[%s294 + $0xb8] sm:$0xff]
        %v362 = vld [vmem:[%s294 + $0xc0] sm:$0xff]
        %v363 = vld [vmem:[%s294 + $0xc8] sm:$0xff]
        %v364 = vld [vmem:[%s294 + $0xd0] sm:$0xff]
        %v365 = vld [vmem:[%s294 + $0xd8] sm:$0xff]
        %v366 = vld [vmem:[%s294 + $0xe0] sm:$0xff]
        %v367 = vld [vmem:[%s294 + $0xe8] sm:$0xff]
        %v368 = vld [vmem:[%s294 + $0xf0] sm:$0xff]
        %v369 = vld [vmem:[%s294 + $0xf8] sm:$0xff]
        %v370 = vld [vmem:[%s244] sm:$0xff]
        %v371 = vld [vmem:[%s244 + $0x8] sm:$0xff]
        %v372 = vld [vmem:[%s244 + $0x10] sm:$0xff]
        %v373 = vld [vmem:[%s244 + $0x18] sm:$0xff]
        %v374 = vld [vmem:[%s244 + $0x20] sm:$0xff]
        %v375 = vld [vmem:[%s244 + $0x28] sm:$0xff]
        %v376 = vld [vmem:[%s244 + $0x30] sm:$0xff]
        %v377 = vld [vmem:[%s244 + $0x38] sm:$0xff]
        %v378 = vld [vmem:[%s244 + $0x40] sm:$0xff]
        %v379 = vld [vmem:[%s244 + $0x48] sm:$0xff]
        %v380 = vld [vmem:[%s244 + $0x50] sm:$0xff]
        %v381 = vld [vmem:[%s244 + $0x58] sm:$0xff]
        %v382 = vld [vmem:[%s244 + $0x60] sm:$0xff]
        %v383 = vld [vmem:[%s244 + $0x68] sm:$0xff]
        %v384 = vld [vmem:[%s244 + $0x70] sm:$0xff]
        %v385 = vld [vmem:[%s244 + $0x78] sm:$0xff]
        %v386 = vld [vmem:[%s244 + $0x80] sm:$0xff]
        %v387 = vld [vmem:[%s244 + $0x88] sm:$0xff]
        %v388 = vld [vmem:[%s244 + $0x90] sm:$0xff]
        %v389 = vld [vmem:[%s244 + $0x98] sm:$0xff]
        %v390 = vld [vmem:[%s244 + $0xa0] sm:$0xff]
        %v391 = vld [vmem:[%s244 + $0xa8] sm:$0xff]
        %v392 = vld [vmem:[%s244 + $0xb0] sm:$0xff]
        %v393 = vld [vmem:[%s244 + $0xb8] sm:$0xff]
        %v394 = vld [vmem:[%s244 + $0xc0] sm:$0xff]
        %v395 = vld [vmem:[%s244 + $0xc8] sm:$0xff]
        %v396 = vld [vmem:[%s244 + $0xd0] sm:$0xff]
        %v397 = vld [vmem:[%s244 + $0xd8] sm:$0xff]
        %v398 = vld [vmem:[%s244 + $0xe0] sm:$0xff]
        %v399 = vld [vmem:[%s244 + $0xe8] sm:$0xff]
        %v400 = vld [vmem:[%s244 + $0xf0] sm:$0xff]
        %v401 = vld [vmem:[%s244 + $0xf8] sm:$0xff]
        %v402 = vld [vmem:[%s244 + $0x100] sm:$0xff]
        %v403 = vld [vmem:[%s244 + $0x108] sm:$0xff]
        %v404 = vld [vmem:[%s244 + $0x110] sm:$0xff]
        %v405 = vld [vmem:[%s244 + $0x118] sm:$0xff]
        %v406 = vld [vmem:[%s244 + $0x120] sm:$0xff]
        %v407 = vld [vmem:[%s244 + $0x128] sm:$0xff]
        %v408 = vld [vmem:[%s244 + $0x130] sm:$0xff]
        %v409 = vld [vmem:[%s244 + $0x138] sm:$0xff]
        %v410 = vld [vmem:[%s244 + $0x140] sm:$0xff]
        %v411 = vld [vmem:[%s244 + $0x148] sm:$0xff]
        %v412 = vld [vmem:[%s244 + $0x150] sm:$0xff]
        %v413 = vld [vmem:[%s244 + $0x158] sm:$0xff]
        %v414 = vld [vmem:[%s244 + $0x160] sm:$0xff]
        %v415 = vld [vmem:[%s244 + $0x168] sm:$0xff]
        %v416 = vld [vmem:[%s244 + $0x170] sm:$0xff]
        %v417 = vld [vmem:[%s244 + $0x178] sm:$0xff]
        %v418 = vld [vmem:[%s244 + $0x180] sm:$0xff]
        %v419 = vld [vmem:[%s244 + $0x188] sm:$0xff]
        %v420 = vld [vmem:[%s244 + $0x190] sm:$0xff]
        %v421 = vld [vmem:[%s244 + $0x198] sm:$0xff]
        %v422 = vld [vmem:[%s244 + $0x1a0] sm:$0xff]
        %v423 = vld [vmem:[%s244 + $0x1a8] sm:$0xff]
        %v424 = vld [vmem:[%s244 + $0x1b0] sm:$0xff]
        %v425 = vld [vmem:[%s244 + $0x1b8] sm:$0xff]
        %v426 = vld [vmem:[%s244 + $0x1c0] sm:$0xff]
        %v427 = vld [vmem:[%s244 + $0x1c8] sm:$0xff]
        %v428 = vld [vmem:[%s244 + $0x1d0] sm:$0xff]
        %v429 = vld [vmem:[%s244 + $0x1d8] sm:$0xff]
        %v430 = vld [vmem:[%s244 + $0x1e0] sm:$0xff]
        %v431 = vld [vmem:[%s244 + $0x1e8] sm:$0xff]
        %v432 = vld [vmem:[%s244 + $0x1f0] sm:$0xff]
        %v433 = vld [vmem:[%s244 + $0x1f8] sm:$0xff]
        %v434 = vld [vmem:[%s253] sm:$0xff]
        %v435 = vld [vmem:[%s253 + $0x8] sm:$0xff]
        %v436 = vld [vmem:[%s253 + $0x10] sm:$0xff]
        %v437 = vld [vmem:[%s253 + $0x18] sm:$0xff]
        %v438 = vld [vmem:[%s253 + $0x20] sm:$0xff]
        %v439 = vld [vmem:[%s253 + $0x28] sm:$0xff]
        %v440 = vld [vmem:[%s253 + $0x30] sm:$0xff]
        %v441 = vld [vmem:[%s253 + $0x38] sm:$0xff]
        %v442 = vld [vmem:[%s253 + $0x40] sm:$0xff]
        %v443 = vld [vmem:[%s253 + $0x48] sm:$0xff]
        %v444 = vld [vmem:[%s253 + $0x50] sm:$0xff]
        %v445 = vld [vmem:[%s253 + $0x58] sm:$0xff]
        %v446 = vld [vmem:[%s253 + $0x60] sm:$0xff]
        %v447 = vld [vmem:[%s253 + $0x68] sm:$0xff]
        %v448 = vld [vmem:[%s253 + $0x70] sm:$0xff]
        %v449 = vld [vmem:[%s253 + $0x78] sm:$0xff]
        %v450 = vld [vmem:[%s253 + $0x80] sm:$0xff]
        %v451 = vld [vmem:[%s253 + $0x88] sm:$0xff]
        %v452 = vld [vmem:[%s253 + $0x90] sm:$0xff]
        %v453 = vld [vmem:[%s253 + $0x98] sm:$0xff]
        %v454 = vld [vmem:[%s253 + $0xa0] sm:$0xff]
        %v455 = vld [vmem:[%s253 + $0xa8] sm:$0xff]
        %v456 = vld [vmem:[%s253 + $0xb0] sm:$0xff]
        %v457 = vld [vmem:[%s253 + $0xb8] sm:$0xff]
        %v458 = vld [vmem:[%s253 + $0xc0] sm:$0xff]
        %v459 = vld [vmem:[%s253 + $0xc8] sm:$0xff]
        %v460 = vld [vmem:[%s253 + $0xd0] sm:$0xff]
        %v461 = vld [vmem:[%s253 + $0xd8] sm:$0xff]
        %v462 = vld [vmem:[%s253 + $0xe0] sm:$0xff]
        %v463 = vld [vmem:[%s253 + $0xe8] sm:$0xff]
        %v464 = vld [vmem:[%s253 + $0xf0] sm:$0xff]
        %v465 = vld [vmem:[%s253 + $0xf8] sm:$0xff]
        %v466 = vld [vmem:[%s253 + $0x100] sm:$0xff]
        %v467 = vld [vmem:[%s253 + $0x108] sm:$0xff]
        %v468 = vld [vmem:[%s253 + $0x110] sm:$0xff]
        %v469 = vld [vmem:[%s253 + $0x118] sm:$0xff]
        %v470 = vld [vmem:[%s253 + $0x120] sm:$0xff]
        %v471 = vld [vmem:[%s253 + $0x128] sm:$0xff]
        %v472 = vld [vmem:[%s253 + $0x130] sm:$0xff]
        %v473 = vld [vmem:[%s253 + $0x138] sm:$0xff]
        %v474 = vld [vmem:[%s253 + $0x140] sm:$0xff]
        %v475 = vld [vmem:[%s253 + $0x148] sm:$0xff]
        %v476 = vld [vmem:[%s253 + $0x150] sm:$0xff]
        %v477 = vld [vmem:[%s253 + $0x158] sm:$0xff]
        %v478 = vld [vmem:[%s253 + $0x160] sm:$0xff]
        %v479 = vld [vmem:[%s253 + $0x168] sm:$0xff]
        %v480 = vld [vmem:[%s253 + $0x170] sm:$0xff]
        %v481 = vld [vmem:[%s253 + $0x178] sm:$0xff]
        %v482 = vld [vmem:[%s253 + $0x180] sm:$0xff]
        %v483 = vld [vmem:[%s253 + $0x188] sm:$0xff]
        %v484 = vld [vmem:[%s253 + $0x190] sm:$0xff]
        %v485 = vld [vmem:[%s253 + $0x198] sm:$0xff]
        %v486 = vld [vmem:[%s253 + $0x1a0] sm:$0xff]
        %v487 = vld [vmem:[%s253 + $0x1a8] sm:$0xff]
        %v488 = vld [vmem:[%s253 + $0x1b0] sm:$0xff]
        %v489 = vld [vmem:[%s253 + $0x1b8] sm:$0xff]
        %v490 = vld [vmem:[%s253 + $0x1c0] sm:$0xff]
        %v491 = vld [vmem:[%s253 + $0x1c8] sm:$0xff]
        %v492 = vld [vmem:[%s253 + $0x1d0] sm:$0xff]
        %v493 = vld [vmem:[%s253 + $0x1d8] sm:$0xff]
        %v494 = vld [vmem:[%s253 + $0x1e0] sm:$0xff]
        %v495 = vld [vmem:[%s253 + $0x1e8] sm:$0xff]
        %v496 = vld [vmem:[%s253 + $0x1f0] sm:$0xff]
        %v497 = vld [vmem:[%s253 + $0x1f8] sm:$0xff]
        %v498 = vld [vmem:[%s253 + $0x200] sm:$0xff]
        %v499 = vld [vmem:[%s253 + $0x208] sm:$0xff]
        %v500 = vld [vmem:[%s253 + $0x210] sm:$0xff]
        %v501 = vld [vmem:[%s253 + $0x218] sm:$0xff]
        %v502 = vld [vmem:[%s253 + $0x220] sm:$0xff]
        %v503 = vld [vmem:[%s253 + $0x228] sm:$0xff]
        %v504 = vld [vmem:[%s253 + $0x230] sm:$0xff]
        %v505 = vld [vmem:[%s253 + $0x238] sm:$0xff]
        %v506 = vld [vmem:[%s253 + $0x240] sm:$0xff]
        %v507 = vld [vmem:[%s253 + $0x248] sm:$0xff]
        %v508 = vld [vmem:[%s253 + $0x250] sm:$0xff]
        %v509 = vld [vmem:[%s253 + $0x258] sm:$0xff]
        %v510 = vld [vmem:[%s253 + $0x260] sm:$0xff]
        %v511 = vld [vmem:[%s253 + $0x268] sm:$0xff]
        %v512 = vld [vmem:[%s253 + $0x270] sm:$0xff]
        %v513 = vld [vmem:[%s253 + $0x278] sm:$0xff]
        %v514 = vld [vmem:[%s253 + $0x280] sm:$0xff]
        %v515 = vld [vmem:[%s253 + $0x288] sm:$0xff]
        %v516 = vld [vmem:[%s253 + $0x290] sm:$0xff]
        %v517 = vld [vmem:[%s253 + $0x298] sm:$0xff]
        %v518 = vld [vmem:[%s253 + $0x2a0] sm:$0xff]
        %v519 = vld [vmem:[%s253 + $0x2a8] sm:$0xff]
        %v520 = vld [vmem:[%s253 + $0x2b0] sm:$0xff]
        %v521 = vld [vmem:[%s253 + $0x2b8] sm:$0xff]
        %v522 = vld [vmem:[%s253 + $0x2c0] sm:$0xff]
        %v523 = vld [vmem:[%s253 + $0x2c8] sm:$0xff]
        %v524 = vld [vmem:[%s253 + $0x2d0] sm:$0xff]
        %v525 = vld [vmem:[%s253 + $0x2d8] sm:$0xff]
        %v526 = vld [vmem:[%s253 + $0x2e0] sm:$0xff]
        %v527 = vld [vmem:[%s253 + $0x2e8] sm:$0xff]
        %v528 = vld [vmem:[%s253 + $0x2f0] sm:$0xff]
        %v529 = vld [vmem:[%s253 + $0x2f8] sm:$0xff]
        %v530 = vld [vmem:[%s253 + $0x300] sm:$0xff]
        %v531 = vld [vmem:[%s253 + $0x308] sm:$0xff]
        %v532 = vld [vmem:[%s253 + $0x310] sm:$0xff]
        %v533 = vld [vmem:[%s253 + $0x318] sm:$0xff]
        %v534 = vld [vmem:[%s253 + $0x320] sm:$0xff]
        %v535 = vld [vmem:[%s253 + $0x328] sm:$0xff]
        %v536 = vld [vmem:[%s253 + $0x330] sm:$0xff]
        %v537 = vld [vmem:[%s253 + $0x338] sm:$0xff]
        %v538 = vld [vmem:[%s253 + $0x340] sm:$0xff]
        %v539 = vld [vmem:[%s253 + $0x348] sm:$0xff]
        %v540 = vld [vmem:[%s253 + $0x350] sm:$0xff]
        %v541 = vld [vmem:[%s253 + $0x358] sm:$0xff]
        %v542 = vld [vmem:[%s253 + $0x360] sm:$0xff]
        %v543 = vld [vmem:[%s253 + $0x368] sm:$0xff]
        %v544 = vld [vmem:[%s253 + $0x370] sm:$0xff]
        %v545 = vld [vmem:[%s253 + $0x378] sm:$0xff]
        %v546 = vld [vmem:[%s253 + $0x380] sm:$0xff]
        %v547 = vld [vmem:[%s253 + $0x388] sm:$0xff]
        %v548 = vld [vmem:[%s253 + $0x390] sm:$0xff]
        %v549 = vld [vmem:[%s253 + $0x398] sm:$0xff]
        %v550 = vld [vmem:[%s253 + $0x3a0] sm:$0xff]
        %v551 = vld [vmem:[%s253 + $0x3a8] sm:$0xff]
        %v552 = vld [vmem:[%s253 + $0x3b0] sm:$0xff]
        %v553 = vld [vmem:[%s253 + $0x3b8] sm:$0xff]
        %v554 = vld [vmem:[%s253 + $0x3c0] sm:$0xff]
        %v555 = vld [vmem:[%s253 + $0x3c8] sm:$0xff]
        %v556 = vld [vmem:[%s253 + $0x3d0] sm:$0xff]
        %v557 = vld [vmem:[%s253 + $0x3d8] sm:$0xff]
        %v558 = vld [vmem:[%s253 + $0x3e0] sm:$0xff]
        %v559 = vld [vmem:[%s253 + $0x3e8] sm:$0xff]
        %v560 = vld [vmem:[%s253 + $0x3f0] sm:$0xff]
        %v561 = vld [vmem:[%s253 + $0x3f8] sm:$0xff]
        %562 = vmatprep.subr.mxu0 %v465
        %563 = vmatpush1.msra.mxu0 %v464
        %564 = vmatprep.subr.mxu0 %v463
        %565 = vmatpush1.msra.mxu0 %v462
        %566 = vmatprep.subr.mxu0 %v461
        %567 = vmatpush1.msra.mxu0 %v460
        %568 = vmatprep.subr.mxu0 %v459
        %569 = vmatpush1.msra.mxu0 %v458
        %570 = vmatprep.subr.mxu0 %v457
        %571 = vmatpush1.msra.mxu0 %v456
        %572 = vmatprep.subr.mxu0 %v455
        %573 = vmatpush1.msra.mxu0 %v454
        %574 = vmatprep.subr.mxu0 %v453
        %575 = vmatpush1.msra.mxu0 %v452
        %576 = vmatprep.subr.mxu0 %v451
        %577 = vmatpush1.msra.mxu0 %v450
        %578 = vmatprep.subr.mxu0 %v449
        %579 = vmatpush1.msra.mxu0 %v448
        %580 = vmatprep.subr.mxu0 %v447
        %581 = vmatpush1.msra.mxu0 %v446
        %582 = vmatprep.subr.mxu0 %v445
        %583 = vmatpush1.msra.mxu0 %v444
        %584 = vmatprep.subr.mxu0 %v443
        %585 = vmatpush1.msra.mxu0 %v442
        %586 = vmatprep.subr.mxu0 %v441
        %587 = vmatpush1.msra.mxu0 %v440
        %588 = vmatprep.subr.mxu0 %v439
        %589 = vmatpush1.msra.mxu0 %v438
        %590 = vmatprep.subr.mxu0 %v437
        %591 = vmatpush1.msra.mxu0 %v436
        %592 = vmatprep.subr.mxu0 %v435
        %593 = vmatpush1.msra.mxu0 %v434
        %594 = vmatprep.subr.mxu0 %v497
        %595 = vmatpush2.msra.mxu0 %v496
        %596 = vmatprep.subr.mxu0 %v495
        %597 = vmatpush2.msra.mxu0 %v494
        %598 = vmatprep.subr.mxu0 %v493
        %599 = vmatpush2.msra.mxu0 %v492
        %600 = vmatprep.subr.mxu0 %v491
        %601 = vmatpush2.msra.mxu0 %v490
        %602 = vmatprep.subr.mxu0 %v489
        %603 = vmatpush2.msra.mxu0 %v488
        %604 = vmatprep.subr.mxu0 %v487
        %605 = vmatpush2.msra.mxu0 %v486
        %606 = vmatprep.subr.mxu0 %v485
        %607 = vmatpush2.msra.mxu0 %v484
        %608 = vmatprep.subr.mxu0 %v483
        %609 = vmatpush2.msra.mxu0 %v482
        %610 = vmatprep.subr.mxu0 %v481
        %611 = vmatpush2.msra.mxu0 %v480
        %612 = vmatprep.subr.mxu0 %v479
        %613 = vmatpush2.msra.mxu0 %v478
        %614 = vmatprep.subr.mxu0 %v477
        %615 = vmatpush2.msra.mxu0 %v476
        %616 = vmatprep.subr.mxu0 %v475
        %617 = vmatpush2.msra.mxu0 %v474
        %618 = vmatprep.subr.mxu0 %v473
        %619 = vmatpush2.msra.mxu0 %v472
        %620 = vmatprep.subr.mxu0 %v471
        %621 = vmatpush2.msra.mxu0 %v470
        %622 = vmatprep.subr.mxu0 %v469
        %623 = vmatpush2.msra.mxu0 %v468
        %624 = vmatprep.subr.mxu0 %v467
        %625 = vmatpush2.msra.mxu0 %v466
        %626 = vmatprep.mubr.f32.mxu0 %v371
        %627 = vmatmul.mubr.f32.gmra.mxu0 %v370
        %v628 = vpop.f32.mrf.mxu0
        %v629 = vadd.f32 0.0, %v628
        %v630 = vpop.f32.mrf.mxu0
        %v631 = vadd.f32 0.0, %v630
        %632 = vmatprep.mubr.f32.mxu0 %v375
        %633 = vmatmul.mubr.f32.gmra.mxu0 %v374
        %v634 = vpop.f32.mrf.mxu0
        %v635 = vadd.f32 0.0, %v634
        %v636 = vpop.f32.mrf.mxu0
        %v637 = vadd.f32 0.0, %v636
        %638 = vmatprep.mubr.f32.mxu0 %v379
        %639 = vmatmul.mubr.f32.gmra.mxu0 %v378
        %v640 = vpop.f32.mrf.mxu0
        %v641 = vadd.f32 0.0, %v640
        %v642 = vpop.f32.mrf.mxu0
        %v643 = vadd.f32 0.0, %v642
        %644 = vmatprep.mubr.f32.mxu0 %v383
        %645 = vmatmul.mubr.f32.gmra.mxu0 %v382
        %v646 = vpop.f32.mrf.mxu0
        %v647 = vadd.f32 0.0, %v646
        %v648 = vpop.f32.mrf.mxu0
        %v649 = vadd.f32 0.0, %v648
        %650 = vmatprep.mubr.f32.mxu0 %v387
        %651 = vmatmul.mubr.f32.gmra.mxu0 %v386
        %v652 = vpop.f32.mrf.mxu0
        %v653 = vadd.f32 0.0, %v652
        %v654 = vpop.f32.mrf.mxu0
        %v655 = vadd.f32 0.0, %v654
        %656 = vmatprep.mubr.f32.mxu0 %v391
        %657 = vmatmul.mubr.f32.gmra.mxu0 %v390
        %v658 = vpop.f32.mrf.mxu0
        %v659 = vadd.f32 0.0, %v658
        %v660 = vpop.f32.mrf.mxu0
        %v661 = vadd.f32 0.0, %v660
        %662 = vmatprep.mubr.f32.mxu0 %v395
        %663 = vmatmul.mubr.f32.gmra.mxu0 %v394
        %v664 = vpop.f32.mrf.mxu0
        %v665 = vadd.f32 0.0, %v664
        %v666 = vpop.f32.mrf.mxu0
        %v667 = vadd.f32 0.0, %v666
        %668 = vmatprep.mubr.f32.mxu0 %v399
        %669 = vmatmul.mubr.f32.gmra.mxu0 %v398
        %v670 = vpop.f32.mrf.mxu0
        %v671 = vadd.f32 0.0, %v670
        %v672 = vpop.f32.mrf.mxu0
        %v673 = vadd.f32 0.0, %v672
        %674 = vmatprep.mubr.f32.mxu0 %v403
        %675 = vmatmul.mubr.f32.gmra.mxu0 %v402
        %v676 = vpop.f32.mrf.mxu0
        %v677 = vadd.f32 0.0, %v676
        %v678 = vpop.f32.mrf.mxu0
        %v679 = vadd.f32 0.0, %v678
        %680 = vmatprep.mubr.f32.mxu0 %v407
        %681 = vmatmul.mubr.f32.gmra.mxu0 %v406
        %v682 = vpop.f32.mrf.mxu0
        %v683 = vadd.f32 0.0, %v682
        %v684 = vpop.f32.mrf.mxu0
        %v685 = vadd.f32 0.0, %v684
        %686 = vmatprep.mubr.f32.mxu0 %v411
        %687 = vmatmul.mubr.f32.gmra.mxu0 %v410
        %v688 = vpop.f32.mrf.mxu0
        %v689 = vadd.f32 0.0, %v688
        %v690 = vpop.f32.mrf.mxu0
        %v691 = vadd.f32 0.0, %v690
        %692 = vmatprep.mubr.f32.mxu0 %v415
        %693 = vmatmul.mubr.f32.gmra.mxu0 %v414
        %v694 = vpop.f32.mrf.mxu0
        %v695 = vadd.f32 0.0, %v694
        %v696 = vpop.f32.mrf.mxu0
        %v697 = vadd.f32 0.0, %v696
        %698 = vmatprep.mubr.f32.mxu0 %v419
        %699 = vmatmul.mubr.f32.gmra.mxu0 %v418
        %v700 = vpop.f32.mrf.mxu0
        %v701 = vadd.f32 0.0, %v700
        %v702 = vpop.f32.mrf.mxu0
        %v703 = vadd.f32 0.0, %v702
        %704 = vmatprep.mubr.f32.mxu0 %v423
        %705 = vmatmul.mubr.f32.gmra.mxu0 %v422
        %v706 = vpop.f32.mrf.mxu0
        %v707 = vadd.f32 0.0, %v706
        %v708 = vpop.f32.mrf.mxu0
        %v709 = vadd.f32 0.0, %v708
        %710 = vmatprep.mubr.f32.mxu0 %v427
        %711 = vmatmul.mubr.f32.gmra.mxu0 %v426
        %v712 = vpop.f32.mrf.mxu0
        %v713 = vadd.f32 0.0, %v712
        %v714 = vpop.f32.mrf.mxu0
        %v715 = vadd.f32 0.0, %v714
        %716 = vmatprep.mubr.f32.mxu0 %v431
        %717 = vmatmul.mubr.f32.gmra.mxu0 %v430
        %v718 = vpop.f32.mrf.mxu0
        %v719 = vadd.f32 0.0, %v718
        %v720 = vpop.f32.mrf.mxu0
        %v721 = vadd.f32 0.0, %v720
        %722 = vdwg.mxu0
        %723 = vmatprep.subr.mxu0 %v529
        %724 = vmatpush1.msra.mxu0 %v528
        %725 = vmatprep.subr.mxu0 %v527
        %726 = vmatpush1.msra.mxu0 %v526
        %727 = vmatprep.subr.mxu0 %v525
        %728 = vmatpush1.msra.mxu0 %v524
        %729 = vmatprep.subr.mxu0 %v523
        %730 = vmatpush1.msra.mxu0 %v522
        %731 = vmatprep.subr.mxu0 %v521
        %732 = vmatpush1.msra.mxu0 %v520
        %733 = vmatprep.subr.mxu0 %v519
        %734 = vmatpush1.msra.mxu0 %v518
        %735 = vmatprep.subr.mxu0 %v517
        %736 = vmatpush1.msra.mxu0 %v516
        %737 = vmatprep.subr.mxu0 %v515
        %738 = vmatpush1.msra.mxu0 %v514
        %739 = vmatprep.subr.mxu0 %v513
        %740 = vmatpush1.msra.mxu0 %v512
        %741 = vmatprep.subr.mxu0 %v511
        %742 = vmatpush1.msra.mxu0 %v510
        %743 = vmatprep.subr.mxu0 %v509
        %744 = vmatpush1.msra.mxu0 %v508
        %745 = vmatprep.subr.mxu0 %v507
        %746 = vmatpush1.msra.mxu0 %v506
        %747 = vmatprep.subr.mxu0 %v505
        %748 = vmatpush1.msra.mxu0 %v504
        %749 = vmatprep.subr.mxu0 %v503
        %750 = vmatpush1.msra.mxu0 %v502
        %751 = vmatprep.subr.mxu0 %v501
        %752 = vmatpush1.msra.mxu0 %v500
        %753 = vmatprep.subr.mxu0 %v499
        %754 = vmatpush1.msra.mxu0 %v498
        %755 = vmatprep.subr.mxu0 %v561
        %756 = vmatpush2.msra.mxu0 %v560
        %757 = vmatprep.subr.mxu0 %v559
        %758 = vmatpush2.msra.mxu0 %v558
        %759 = vmatprep.subr.mxu0 %v557
        %760 = vmatpush2.msra.mxu0 %v556
        %761 = vmatprep.subr.mxu0 %v555
        %762 = vmatpush2.msra.mxu0 %v554
        %763 = vmatprep.subr.mxu0 %v553
        %764 = vmatpush2.msra.mxu0 %v552
        %765 = vmatprep.subr.mxu0 %v551
        %766 = vmatpush2.msra.mxu0 %v550
        %767 = vmatprep.subr.mxu0 %v549
        %768 = vmatpush2.msra.mxu0 %v548
        %769 = vmatprep.subr.mxu0 %v547
        %770 = vmatpush2.msra.mxu0 %v546
        %771 = vmatprep.subr.mxu0 %v545
        %772 = vmatpush2.msra.mxu0 %v544
        %773 = vmatprep.subr.mxu0 %v543
        %774 = vmatpush2.msra.mxu0 %v542
        %775 = vmatprep.subr.mxu0 %v541
        %776 = vmatpush2.msra.mxu0 %v540
        %777 = vmatprep.subr.mxu0 %v539
        %778 = vmatpush2.msra.mxu0 %v538
        %779 = vmatprep.subr.mxu0 %v537
        %780 = vmatpush2.msra.mxu0 %v536
        %781 = vmatprep.subr.mxu0 %v535
        %782 = vmatpush2.msra.mxu0 %v534
        %783 = vmatprep.subr.mxu0 %v533
        %784 = vmatpush2.msra.mxu0 %v532
        %785 = vmatprep.subr.mxu0 %v531
        %786 = vmatpush2.msra.mxu0 %v530
        %787 = vmatprep.mubr.f32.mxu0 %v373
        %788 = vmatmul.mubr.f32.gmra.mxu0 %v372
        %v789 = vpop.f32.mrf.mxu0
        %v790 = vadd.f32 %v629, %v789
        %v791 = vpop.f32.mrf.mxu0
        %v792 = vadd.f32 %v631, %v791
        %793 = vmatprep.mubr.f32.mxu0 %v377
        %794 = vmatmul.mubr.f32.gmra.mxu0 %v376
        %v795 = vpop.f32.mrf.mxu0
        %v796 = vadd.f32 %v635, %v795
        %v797 = vpop.f32.mrf.mxu0
        %v798 = vadd.f32 %v637, %v797
        %799 = vmatprep.mubr.f32.mxu0 %v381
        %800 = vmatmul.mubr.f32.gmra.mxu0 %v380
        %v801 = vpop.f32.mrf.mxu0
        %v802 = vadd.f32 %v641, %v801
        %v803 = vpop.f32.mrf.mxu0
        %v804 = vadd.f32 %v643, %v803
        %805 = vmatprep.mubr.f32.mxu0 %v385
        %806 = vmatmul.mubr.f32.gmra.mxu0 %v384
        %v807 = vpop.f32.mrf.mxu0
        %v808 = vadd.f32 %v647, %v807
        %v809 = vpop.f32.mrf.mxu0
        %v810 = vadd.f32 %v649, %v809
        %811 = vmatprep.mubr.f32.mxu0 %v389
        %812 = vmatmul.mubr.f32.gmra.mxu0 %v388
        %v813 = vpop.f32.mrf.mxu0
        %v814 = vadd.f32 %v653, %v813
        %v815 = vpop.f32.mrf.mxu0
        %v816 = vadd.f32 %v655, %v815
        %817 = vmatprep.mubr.f32.mxu0 %v393
        %818 = vmatmul.mubr.f32.gmra.mxu0 %v392
        %v819 = vpop.f32.mrf.mxu0
        %v820 = vadd.f32 %v659, %v819
        %v821 = vpop.f32.mrf.mxu0
        %v822 = vadd.f32 %v661, %v821
        %823 = vmatprep.mubr.f32.mxu0 %v397
        %824 = vmatmul.mubr.f32.gmra.mxu0 %v396
        %v825 = vpop.f32.mrf.mxu0
        %v826 = vadd.f32 %v665, %v825
        %v827 = vpop.f32.mrf.mxu0
        %v828 = vadd.f32 %v667, %v827
        %829 = vmatprep.mubr.f32.mxu0 %v401
        %830 = vmatmul.mubr.f32.gmra.mxu0 %v400
        %v831 = vpop.f32.mrf.mxu0
        %v832 = vadd.f32 %v671, %v831
        %v833 = vpop.f32.mrf.mxu0
        %v834 = vadd.f32 %v673, %v833
        %835 = vmatprep.mubr.f32.mxu0 %v405
        %836 = vmatmul.mubr.f32.gmra.mxu0 %v404
        %v837 = vpop.f32.mrf.mxu0
        %v838 = vadd.f32 %v677, %v837
        %v839 = vpop.f32.mrf.mxu0
        %v840 = vadd.f32 %v679, %v839
        %841 = vmatprep.mubr.f32.mxu0 %v409
        %842 = vmatmul.mubr.f32.gmra.mxu0 %v408
        %v843 = vpop.f32.mrf.mxu0
        %v844 = vadd.f32 %v683, %v843
        %v845 = vpop.f32.mrf.mxu0
        %v846 = vadd.f32 %v685, %v845
        %847 = vmatprep.mubr.f32.mxu0 %v413
        %848 = vmatmul.mubr.f32.gmra.mxu0 %v412
        %v849 = vpop.f32.mrf.mxu0
        %v850 = vadd.f32 %v689, %v849
        %v851 = vpop.f32.mrf.mxu0
        %v852 = vadd.f32 %v691, %v851
        %853 = vmatprep.mubr.f32.mxu0 %v417
        %854 = vmatmul.mubr.f32.gmra.mxu0 %v416
        %v855 = vpop.f32.mrf.mxu0
        %v856 = vadd.f32 %v695, %v855
        %v857 = vpop.f32.mrf.mxu0
        %v858 = vadd.f32 %v697, %v857
        %859 = vmatprep.mubr.f32.mxu0 %v421
        %860 = vmatmul.mubr.f32.gmra.mxu0 %v420
        %v861 = vpop.f32.mrf.mxu0
        %v862 = vadd.f32 %v701, %v861
        %v863 = vpop.f32.mrf.mxu0
        %v864 = vadd.f32 %v703, %v863
        %865 = vmatprep.mubr.f32.mxu0 %v425
        %866 = vmatmul.mubr.f32.gmra.mxu0 %v424
        %v867 = vpop.f32.mrf.mxu0
        %v868 = vadd.f32 %v707, %v867
        %v869 = vpop.f32.mrf.mxu0
        %v870 = vadd.f32 %v709, %v869
        %871 = vmatprep.mubr.f32.mxu0 %v429
        %872 = vmatmul.mubr.f32.gmra.mxu0 %v428
        %v873 = vpop.f32.mrf.mxu0
        %v874 = vadd.f32 %v713, %v873
        %v875 = vpop.f32.mrf.mxu0
        %v876 = vadd.f32 %v715, %v875
        %877 = vmatprep.mubr.f32.mxu0 %v433
        %878 = vmatmul.mubr.f32.gmra.mxu0 %v432
        %v879 = vpop.f32.mrf.mxu0
        %v880 = vadd.f32 %v719, %v879
        %v881 = vpop.f32.mrf.mxu0
        %v882 = vadd.f32 %v721, %v881
        %883 = vdwg.mxu0
        %v884 = vadd.f32 %v338, %v790
        %v885 = vadd.f32 %v339, %v792
        %v886 = vadd.f32 %v340, %v796
        %v887 = vadd.f32 %v341, %v798
        %v888 = vadd.f32 %v342, %v802
        %v889 = vadd.f32 %v343, %v804
        %v890 = vadd.f32 %v344, %v808
        %v891 = vadd.f32 %v345, %v810
        %v892 = vadd.f32 %v346, %v814
        %v893 = vadd.f32 %v347, %v816
        %v894 = vadd.f32 %v348, %v820
        %v895 = vadd.f32 %v349, %v822
        %v896 = vadd.f32 %v350, %v826
        %v897 = vadd.f32 %v351, %v828
        %v898 = vadd.f32 %v352, %v832
        %v899 = vadd.f32 %v353, %v834
        %v900 = vadd.f32 %v354, %v838
        %v901 = vadd.f32 %v355, %v840
        %v902 = vadd.f32 %v356, %v844
        %v903 = vadd.f32 %v357, %v846
        %v904 = vadd.f32 %v358, %v850
        %v905 = vadd.f32 %v359, %v852
        %v906 = vadd.f32 %v360, %v856
        %v907 = vadd.f32 %v361, %v858
        %v908 = vadd.f32 %v362, %v862
        %v909 = vadd.f32 %v363, %v864
        %v910 = vadd.f32 %v364, %v868
        %v911 = vadd.f32 %v365, %v870
        %v912 = vadd.f32 %v366, %v874
        %v913 = vadd.f32 %v367, %v876
        %v914 = vadd.f32 %v368, %v880
        %v915 = vadd.f32 %v369, %v882
        %916 = vst [vmem:[%s294] sm:$0xff] %v884
        %917 = vst [vmem:[%s294 + $0x8] sm:$0xff] %v885
        %918 = vst [vmem:[%s294 + $0x10] sm:$0xff] %v886
        %919 = vst [vmem:[%s294 + $0x18] sm:$0xff] %v887
        %920 = vst [vmem:[%s294 + $0x20] sm:$0xff] %v888
        %921 = vst [vmem:[%s294 + $0x28] sm:$0xff] %v889
        %922 = vst [vmem:[%s294 + $0x30] sm:$0xff] %v890
        %923 = vst [vmem:[%s294 + $0x38] sm:$0xff] %v891
        %924 = vst [vmem:[%s294 + $0x40] sm:$0xff] %v892
        %925 = vst [vmem:[%s294 + $0x48] sm:$0xff] %v893
        %926 = vst [vmem:[%s294 + $0x50] sm:$0xff] %v894
        %927 = vst [vmem:[%s294 + $0x58] sm:$0xff] %v895
        %928 = vst [vmem:[%s294 + $0x60] sm:$0xff] %v896
        %929 = vst [vmem:[%s294 + $0x68] sm:$0xff] %v897
        %930 = vst [vmem:[%s294 + $0x70] sm:$0xff] %v898
        %931 = vst [vmem:[%s294 + $0x78] sm:$0xff] %v899
        %932 = vst [vmem:[%s294 + $0x80] sm:$0xff] %v900
        %933 = vst [vmem:[%s294 + $0x88] sm:$0xff] %v901
        %934 = vst [vmem:[%s294 + $0x90] sm:$0xff] %v902
        %935 = vst [vmem:[%s294 + $0x98] sm:$0xff] %v903
        %936 = vst [vmem:[%s294 + $0xa0] sm:$0xff] %v904
        %937 = vst [vmem:[%s294 + $0xa8] sm:$0xff] %v905
        %938 = vst [vmem:[%s294 + $0xb0] sm:$0xff] %v906
        %939 = vst [vmem:[%s294 + $0xb8] sm:$0xff] %v907
        %940 = vst [vmem:[%s294 + $0xc0] sm:$0xff] %v908
        %941 = vst [vmem:[%s294 + $0xc8] sm:$0xff] %v909
        %942 = vst [vmem:[%s294 + $0xd0] sm:$0xff] %v910
        %943 = vst [vmem:[%s294 + $0xd8] sm:$0xff] %v911
        %944 = vst [vmem:[%s294 + $0xe0] sm:$0xff] %v912
        %945 = vst [vmem:[%s294 + $0xe8] sm:$0xff] %v913
        %946 = vst [vmem:[%s294 + $0xf0] sm:$0xff] %v914
        %947 = vst [vmem:[%s294 + $0xf8] sm:$0xff] %v915
        %p948 = scmp.eq.s32.totalorder %s30, 1
        // Predicated region
        $region49: #{tpu_custom_call.1} parent=31 // pred_check
          %p949 = pneg %p948
        $region50: #{tpu_custom_call.1} parent=31 // pred_check_branch
          %951 = sbr.rel (%p949) target = $region52
        $region51: #{tpu_custom_call.1} parent=31 // pred_region
          %v952 = vld [vmem:[%s294] sm:$0xff]
          %v953 = vld [vmem:[%s294 + $0x8] sm:$0xff]
          %v954 = vld [vmem:[%s294 + $0x10] sm:$0xff]
          %v955 = vld [vmem:[%s294 + $0x18] sm:$0xff]
          %v956 = vld [vmem:[%s294 + $0x20] sm:$0xff]
          %v957 = vld [vmem:[%s294 + $0x28] sm:$0xff]
          %v958 = vld [vmem:[%s294 + $0x30] sm:$0xff]
          %v959 = vld [vmem:[%s294 + $0x38] sm:$0xff]
          %v960 = vld [vmem:[%s294 + $0x40] sm:$0xff]
          %v961 = vld [vmem:[%s294 + $0x48] sm:$0xff]
          %v962 = vld [vmem:[%s294 + $0x50] sm:$0xff]
          %v963 = vld [vmem:[%s294 + $0x58] sm:$0xff]
          %v964 = vld [vmem:[%s294 + $0x60] sm:$0xff]
          %v965 = vld [vmem:[%s294 + $0x68] sm:$0xff]
          %v966 = vld [vmem:[%s294 + $0x70] sm:$0xff]
          %v967 = vld [vmem:[%s294 + $0x78] sm:$0xff]
          %v968 = vld [vmem:[%s294 + $0x80] sm:$0xff]
          %v969 = vld [vmem:[%s294 + $0x88] sm:$0xff]
          %v970 = vld [vmem:[%s294 + $0x90] sm:$0xff]
          %v971 = vld [vmem:[%s294 + $0x98] sm:$0xff]
          %v972 = vld [vmem:[%s294 + $0xa0] sm:$0xff]
          %v973 = vld [vmem:[%s294 + $0xa8] sm:$0xff]
          %v974 = vld [vmem:[%s294 + $0xb0] sm:$0xff]
          %v975 = vld [vmem:[%s294 + $0xb8] sm:$0xff]
          %v976 = vld [vmem:[%s294 + $0xc0] sm:$0xff]
          %v977 = vld [vmem:[%s294 + $0xc8] sm:$0xff]
          %v978 = vld [vmem:[%s294 + $0xd0] sm:$0xff]
          %v979 = vld [vmem:[%s294 + $0xd8] sm:$0xff]
          %v980 = vld [vmem:[%s294 + $0xe0] sm:$0xff]
          %v981 = vld [vmem:[%s294 + $0xe8] sm:$0xff]
          %v982 = vld [vmem:[%s294 + $0xf0] sm:$0xff]
          %v983 = vld [vmem:[%s294 + $0xf8] sm:$0xff]
          %v984 = vld [vmem:[%s262] sm:$0x3]
          %v986 = vlaneseq
          %v987 = vshrl.u32 %v986, 7
          %v988 = vsub.s32 0, %v987
          %v989 = vrot.slane %v984, %v988
          %v990 = vlaneseq
          %v991 = vshrl.u32 %v990, 7
          %v992 = vsub.s32 1, %v991
          %v993 = vrot.slane %v984, %v992
          %v996 = vadd.f32 %v952, %v989
          %v997 = vadd.f32 %v953, %v993
          %v998 = vadd.f32 %v954, %v989
          %v999 = vadd.f32 %v955, %v993
          %v1000 = vadd.f32 %v956, %v989
          %v1001 = vadd.f32 %v957, %v993
          %v1002 = vadd.f32 %v958, %v989
          %v1003 = vadd.f32 %v959, %v993
          %v1004 = vadd.f32 %v960, %v989
          %v1005 = vadd.f32 %v961, %v993
          %v1006 = vadd.f32 %v962, %v989
          %v1007 = vadd.f32 %v963, %v993
          %v1008 = vadd.f32 %v964, %v989
          %v1009 = vadd.f32 %v965, %v993
          %v1010 = vadd.f32 %v966, %v989
          %v1011 = vadd.f32 %v967, %v993
          %v1012 = vadd.f32 %v968, %v989
          %v1013 = vadd.f32 %v969, %v993
          %v1014 = vadd.f32 %v970, %v989
          %v1015 = vadd.f32 %v971, %v993
          %v1016 = vadd.f32 %v972, %v989
          %v1017 = vadd.f32 %v973, %v993
          %v1018 = vadd.f32 %v974, %v989
          %v1019 = vadd.f32 %v975, %v993
          %v1020 = vadd.f32 %v976, %v989
          %v1021 = vadd.f32 %v977, %v993
          %v1022 = vadd.f32 %v978, %v989
          %v1023 = vadd.f32 %v979, %v993
          %v1024 = vadd.f32 %v980, %v989
          %v1025 = vadd.f32 %v981, %v993
          %v1026 = vadd.f32 %v982, %v989
          %v1027 = vadd.f32 %v983, %v993
          %v1028 = vmax.f32 %v996, 0.0
          %v1029 = vmax.f32 %v997, 0.0
          %v1030 = vmax.f32 %v998, 0.0
          %v1031 = vmax.f32 %v999, 0.0
          %v1032 = vmax.f32 %v1000, 0.0
          %v1033 = vmax.f32 %v1001, 0.0
          %v1034 = vmax.f32 %v1002, 0.0
          %v1035 = vmax.f32 %v1003, 0.0
          %v1036 = vmax.f32 %v1004, 0.0
          %v1037 = vmax.f32 %v1005, 0.0
          %v1038 = vmax.f32 %v1006, 0.0
          %v1039 = vmax.f32 %v1007, 0.0
          %v1040 = vmax.f32 %v1008, 0.0
          %v1041 = vmax.f32 %v1009, 0.0
          %v1042 = vmax.f32 %v1010, 0.0
          %v1043 = vmax.f32 %v1011, 0.0
          %v1044 = vmax.f32 %v1012, 0.0
          %v1045 = vmax.f32 %v1013, 0.0
          %v1046 = vmax.f32 %v1014, 0.0
          %v1047 = vmax.f32 %v1015, 0.0
          %v1048 = vmax.f32 %v1016, 0.0
          %v1049 = vmax.f32 %v1017, 0.0
          %v1050 = vmax.f32 %v1018, 0.0
          %v1051 = vmax.f32 %v1019, 0.0
          %v1052 = vmax.f32 %v1020, 0.0
          %v1053 = vmax.f32 %v1021, 0.0
          %v1054 = vmax.f32 %v1022, 0.0
          %v1055 = vmax.f32 %v1023, 0.0
          %v1056 = vmax.f32 %v1024, 0.0
          %v1057 = vmax.f32 %v1025, 0.0
          %v1058 = vmax.f32 %v1026, 0.0
          %v1059 = vmax.f32 %v1027, 0.0
          %v1060 = vmul.f32 %v1028, 0.5
          %v1061 = vmul.f32 %v1029, 0.5
          %v1062 = vmul.f32 %v1030, 0.5
          %v1063 = vmul.f32 %v1031, 0.5
          %v1064 = vmul.f32 %v1032, 0.5
          %v1065 = vmul.f32 %v1033, 0.5
          %v1066 = vmul.f32 %v1034, 0.5
          %v1067 = vmul.f32 %v1035, 0.5
          %v1068 = vmul.f32 %v1036, 0.5
          %v1069 = vmul.f32 %v1037, 0.5
          %v1070 = vmul.f32 %v1038, 0.5
          %v1071 = vmul.f32 %v1039, 0.5
          %v1072 = vmul.f32 %v1040, 0.5
          %v1073 = vmul.f32 %v1041, 0.5
          %v1074 = vmul.f32 %v1042, 0.5
          %v1075 = vmul.f32 %v1043, 0.5
          %v1076 = vmul.f32 %v1044, 0.5
          %v1077 = vmul.f32 %v1045, 0.5
          %v1078 = vmul.f32 %v1046, 0.5
          %v1079 = vmul.f32 %v1047, 0.5
          %v1080 = vmul.f32 %v1048, 0.5
          %v1081 = vmul.f32 %v1049, 0.5
          %v1082 = vmul.f32 %v1050, 0.5
          %v1083 = vmul.f32 %v1051, 0.5
          %v1084 = vmul.f32 %v1052, 0.5
          %v1085 = vmul.f32 %v1053, 0.5
          %v1086 = vmul.f32 %v1054, 0.5
          %v1087 = vmul.f32 %v1055, 0.5
          %v1088 = vmul.f32 %v1056, 0.5
          %v1089 = vmul.f32 %v1057, 0.5
          %v1090 = vmul.f32 %v1058, 0.5
          %v1091 = vmul.f32 %v1059, 0.5
          %1092 = vst [vmem:[%s294] sm:$0xff] %v1060
          %1093 = vst [vmem:[%s294 + $0x8] sm:$0xff] %v1061
          %1094 = vst [vmem:[%s294 + $0x10] sm:$0xff] %v1062
          %1095 = vst [vmem:[%s294 + $0x18] sm:$0xff] %v1063
          %1096 = vst [vmem:[%s294 + $0x20] sm:$0xff] %v1064
          %1097 = vst [vmem:[%s294 + $0x28] sm:$0xff] %v1065
          %1098 = vst [vmem:[%s294 + $0x30] sm:$0xff] %v1066
          %1099 = vst [vmem:[%s294 + $0x38] sm:$0xff] %v1067
          %1100 = vst [vmem:[%s294 + $0x40] sm:$0xff] %v1068
          %1101 = vst [vmem:[%s294 + $0x48] sm:$0xff] %v1069
          %1102 = vst [vmem:[%s294 + $0x50] sm:$0xff] %v1070
          %1103 = vst [vmem:[%s294 + $0x58] sm:$0xff] %v1071
          %1104 = vst [vmem:[%s294 + $0x60] sm:$0xff] %v1072
          %1105 = vst [vmem:[%s294 + $0x68] sm:$0xff] %v1073
          %1106 = vst [vmem:[%s294 + $0x70] sm:$0xff] %v1074
          %1107 = vst [vmem:[%s294 + $0x78] sm:$0xff] %v1075
          %1108 = vst [vmem:[%s294 + $0x80] sm:$0xff] %v1076
          %1109 = vst [vmem:[%s294 + $0x88] sm:$0xff] %v1077
          %1110 = vst [vmem:[%s294 + $0x90] sm:$0xff] %v1078
          %1111 = vst [vmem:[%s294 + $0x98] sm:$0xff] %v1079
          %1112 = vst [vmem:[%s294 + $0xa0] sm:$0xff] %v1080
          %1113 = vst [vmem:[%s294 + $0xa8] sm:$0xff] %v1081
          %1114 = vst [vmem:[%s294 + $0xb0] sm:$0xff] %v1082
          %1115 = vst [vmem:[%s294 + $0xb8] sm:$0xff] %v1083
          %1116 = vst [vmem:[%s294 + $0xc0] sm:$0xff] %v1084
          %1117 = vst [vmem:[%s294 + $0xc8] sm:$0xff] %v1085
          %1118 = vst [vmem:[%s294 + $0xd0] sm:$0xff] %v1086
          %1119 = vst [vmem:[%s294 + $0xd8] sm:$0xff] %v1087
          %1120 = vst [vmem:[%s294 + $0xe0] sm:$0xff] %v1088
          %1121 = vst [vmem:[%s294 + $0xe8] sm:$0xff] %v1089
          %1122 = vst [vmem:[%s294 + $0xf0] sm:$0xff] %v1090
          %1123 = vst [vmem:[%s294 + $0xf8] sm:$0xff] %v1091
        $region52: #{tpu_custom_call.1} parent=31 // pred_fallthru
          _
        %s1124 = sand.u32 %s134, 1
        %s1125 = scalar_lea.sflag [#allocation4], %s1124
        %s1126 = sand.u32 %s134, 1
        %s1127 = smul.addr %s1126, 256
        %s1128 = scalar_lea.vmem [#allocation8], %s1127
        // Predicated region
        $region53: #{tpu_custom_call.1} parent=31 // pred_check
          %p1129 = pneg %p144
        $region54: #{tpu_custom_call.1} parent=31 // pred_check_branch
          %1131 = sbr.rel (%p1129) target = $region56
        $region55: #{tpu_custom_call.1} parent=31 // pred_region
          %s1132 = smul.u32 16, %s28
          %s1133 = smul.u32 2, %s29
          %s1135 = ssub.s32 4096, 4096
          %1136 = vsyncadd %s1125, %s1135
          %s1137 = smul.addr %s1132, 4
          %s1138 = sadd.s32 %s1133, %s1137
          %s1139 = smul.addr %s1138, 128
          %s1140 = scalar_lea.hbm %s3, %s1139
          %s1141 = sshll.u32 %s1128, 4
          %s1142 = int_to_ptr.vmem [resolvable:$true] %s1141
          %1147 = dma.vmem_to_hbm [thread:$0]  %s1142, 4096, %s1140, %s1125, 256, 512, 16
        $region56: #{tpu_custom_call.1} parent=31 // pred_fallthru
          _
      $region32: #{tpu_custom_call.1} parent=5 // pred_fallthru
        _
      %p1148 = scmp.le.s32.totalorder 2, %s18
      // Predicated region
      $region57: #{tpu_custom_call.1} parent=5 // pred_check
        %p1149 = pneg %p1148
      $region58: #{tpu_custom_call.1} parent=5 // pred_check_branch
        %1151 = sbr.rel (%p1149) target = $region60
      $region59: #{tpu_custom_call.1} parent=5 // pred_region
        %s1152 = ssub.s32 %s18, 2
        // Predicated region
        $region61: #{tpu_custom_call.1} parent=59 // pred_check
          %p1153 = pneg %p150
        $region62: #{tpu_custom_call.1} parent=59 // pred_check_branch
          %1155 = sbr.rel (%p1153) target = $region64
        $region63: #{tpu_custom_call.1} parent=59 // pred_region
          %s1156 = sand.u32 %s135, 1
          %s1157 = scalar_lea.sflag [#allocation4], %s1156
          %s1158 = sand.u32 %s135, 1
          %s1159 = smul.addr %s1158, 256
          %s1160 = scalar_lea.vmem [#allocation8], %s1159
          %1161 = dma.done %s1157, 4096
        $region64: #{tpu_custom_call.1} parent=59 // pred_fallthru
          _
      $region60: #{tpu_custom_call.1} parent=5 // pred_fallthru
        _
    $region6: #{tpu_custom_call.1} parent=1 // loop_footer
      %s22 = sadd.s32 1, %s18
    $region7: #{tpu_custom_call.1} parent=1 // loop_footer_branch
      %17 = sbr.rel target = $region3
    $region8: #{tpu_custom_call.1} parent=1 // loop_exit
      _
    %1162 = vsyncpa [#allocation3], 1
    %s1163 = scalar_lea.sflag [#allocation3], 1
    %1164 = vsyncpa %s1163, 1
    %1165 = vsyncpa [#allocation6], 1
    %s1166 = scalar_lea.sflag [#allocation6], 1
    %1167 = vsyncpa %s1166, 1
    %1168 = vsyncpa [#allocation4], 1
    %s1169 = scalar_lea.sflag [#allocation4], 1
    %1170 = vsyncpa %s1169, 1

</llo_original>
